<compile_context>
chip_gen: v5e
topology: v5e:2x2
jax: 0.10.0
libtpu: 0.0.40
codegen_flags: <defaults>
</compile_context>

<pallas_src>
import math
import functools

import jax
import jax.numpy as jnp
from jax import lax
from jax.experimental import pallas as pl
from jax.experimental.pallas import tpu as pltpu


def _attention_kernel(x_ref, w_ref, b_ref, o_ref, *, scale_inv):
    bt, n, d = x_ref.shape

    # --- fused QKV projection: fold batch into M, one wide matmul -----------
    xm = x_ref[...].reshape(bt * n, d)                                # (Bt*N, D)
    qkv = jnp.dot(xm, w_ref[...],
                  preferred_element_type=jnp.float32) + b_ref[...]   # (Bt*N, 3D)

    q = qkv[:, 0 * d:1 * d].reshape(bt, n, d)
    k = qkv[:, 1 * d:2 * d].reshape(bt, n, d)
    v = qkv[:, 2 * d:3 * d].reshape(bt, n, d)

    # --- scores: batched dot contracting last axes (no transpose of K) ------
    s = lax.dot_general(
        q.astype(jnp.bfloat16), k.astype(jnp.bfloat16),
        dimension_numbers=(((2,), (2,)), ((0,), (0,))),
        preferred_element_type=jnp.float32) * scale_inv               # (Bt, N, N)

    # --- numerically stable softmax (elementwise kept in f32) ---------------
    m = jnp.max(s, axis=-1, keepdims=True)
    p = jnp.exp(s - m)
    p = p * pl.reciprocal(jnp.sum(p, axis=-1, keepdims=True), approx=True)

    # --- weighted sum: bf16 MXU inputs, f32 accumulation ---------------------
    out = lax.dot_general(
        p.astype(jnp.bfloat16), v.astype(jnp.bfloat16),
        dimension_numbers=(((2,), (1,)), ((0,), (0,))),
        preferred_element_type=jnp.float32)                           # (Bt, N, D)

    o_ref[...] = out.astype(o_ref.dtype)


def _pick_block_b(batch, n, d, budget_bytes=16 * 1024 * 1024):
    """Largest batch tile (divisor of `batch`) whose f32 working set fits a
    conservative VMEM budget; prefers a grid of >= 2 steps (megacore sharding)
    only when the MXU M dimension (Bt*N) stays >= 128."""
    def working_set(bt):
        return 4 * (2 * bt * n * d          # x block (double buffered)
                    + 4 * bt * n * d        # qkv + q/k/v
                    + 2 * bt * n * n        # scores + probs
                    + 2 * bt * n * d        # out block (double buffered)
                    + d * 3 * d + 3 * d)    # fused weights + bias

    best = 1
    for bt in range(1, batch + 1):
        if batch % bt == 0 and working_set(bt) <= budget_bytes:
            best = bt
    if best == batch and batch > 1:
        # Prefer a parallel grid of >= 2 when it does not underfill the MXU.
        for bt in range(batch // 2, 0, -1):
            if batch % bt == 0 and bt * n >= 128 and working_set(bt) <= budget_bytes:
                return bt
    return best


def attention_forward(x, wq, bq, wk, bk, wv, bv):
    """x: (B, N, D) float32.  wq/wk/wv: (D, D) in PyTorch (out, in) layout.
    bq/bk/bv: (D,)."""
    B, N, D = x.shape
    scale_inv = 1.0 / math.sqrt(float(D))

    # Fuse the three Linear layers: W_qkv is (D_in, 3*D_out); b_qkv is (1, 3D).
    w_qkv = jnp.concatenate([wq.T, wk.T, wv.T], axis=1)
    b_qkv = jnp.concatenate([bq, bk, bv]).reshape(1, 3 * D)

    Bt = _pick_block_b(B, N, D)
    grid = (B // Bt,)

    kernel = functools.partial(_attention_kernel, scale_inv=scale_inv)

    cost = pl.CostEstimate(
        flops=2 * B * N * 3 * D * D + 4 * B * N * N * D,
        transcendentals=B * N * N,
        bytes_accessed=4 * (2 * B * N * D + 3 * D * D + 3 * D),
    )

    return pl.pallas_call(
        kernel,
        out_shape=jax.ShapeDtypeStruct((B, N, D), x.dtype),
        grid_spec=pltpu.PrefetchScalarGridSpec(
            num_scalar_prefetch=0,
            grid=grid,
            in_specs=[
                pl.BlockSpec((Bt, N, D), lambda b: (b, 0, 0)),   # x
                pl.BlockSpec((D, 3 * D), lambda b: (0, 0)),      # fused W_qkv
                pl.BlockSpec((1, 3 * D), lambda b: (0, 0)),      # fused b_qkv
            ],
            out_specs=pl.BlockSpec((Bt, N, D), lambda b: (b, 0, 0)),
        ),
        compiler_params=pltpu.CompilerParams(
            dimension_semantics=("parallel",)),
        cost_estimate=cost,
    )(x, w_qkv, b_qkv)


def attention_reference(x, wq, bq, wk, bk, wv, bv):
    D = x.shape[-1]
    q = jnp.einsum("bnd,ed->bne", x, wq) + bq
    k = jnp.einsum("bnd,ed->bne", x, wk) + bk
    v = jnp.einsum("bnd,ed->bne", x, wv) + bv
    scores = jnp.einsum("bnd,bmd->bnm", q, k) / jnp.sqrt(jnp.float32(D))
    attn = jax.nn.softmax(scores, axis=-1)
    return jnp.einsum("bnm,bmd->bnd", attn, v)


if __name__ == "__main__":
    B, N, D = 2, 8, 32  # batch, num_columns (seq), feature_dim

    key = jax.random.PRNGKey(0)
    kx, kq, kbq, kk, kbk, kv, kbv = jax.random.split(key, 7)

    x = jax.random.normal(kx, (B, N, D), dtype=jnp.float32)

    # Deterministic parameter init mimicking nn.Linear default (uniform +/- 1/sqrt(D)).
    bound = 1.0 / math.sqrt(D)
    wq = jax.random.uniform(kq,  (D, D), jnp.float32, -bound, bound)
    bq = jax.random.uniform(kbq, (D,),   jnp.float32, -bound, bound)
    wk = jax.random.uniform(kk,  (D, D), jnp.float32, -bound, bound)
    bk = jax.random.uniform(kbk, (D,),   jnp.float32, -bound, bound)
    wv = jax.random.uniform(kv,  (D, D), jnp.float32, -bound, bound)
    bv = jax.random.uniform(kbv, (D,),   jnp.float32, -bound, bound)

    out = attention_forward(x, wq, bq, wk, bk, wv, bv)
    out = jax.block_until_ready(out)

    ref = attention_reference(x, wq, bq, wk, bk, wv, bv)
    assert out.shape == (B, N, D)
    # Tolerance accounts for bf16 MXU inputs (f32 accumulation) in both
    # attention matmuls and the approx reciprocal in the softmax denominator.
    assert jnp.allclose(out, ref, rtol=2e-2, atol=2e-2), "mismatch vs reference"

    print("KERNEL_OK")
</pallas_src>

<mosaic_0001>
module attributes {stable_mosaic.version = 11 : i64} {
  func.func @_attention_kernel(%arg0: i32, %arg1: memref<2x8x32xf32, #tpu.memory_space<vmem>>, %arg2: memref<32x96xf32, #tpu.memory_space<vmem>>, %arg3: memref<1x96xf32, #tpu.memory_space<vmem>>, %arg4: memref<2x8x32xf32, #tpu.memory_space<vmem>>) attributes {dimension_semantics = [#tpu.dimension_semantics<parallel>], iteration_bounds = array<i64: 1>, scalar_prefetch = 0 : i64, scratch_operands = 0 : i64, tpu.core_type = #tpu.core_type<tc>, window_params = [{transform_indices = @transform_0, window_bounds = array<i64: 2, 8, 32>}, {pipeline_mode = #tpu.pipeline_mode<synchronous>, transform_indices = @transform_1, window_bounds = array<i64: 32, 96>}, {pipeline_mode = #tpu.pipeline_mode<synchronous>, transform_indices = @transform_2, window_bounds = array<i64: 1, 96>}, {transform_indices = @transform_3, window_bounds = array<i64: 2, 8, 32>}]} {
    %c0 = arith.constant 0 : index
    %c0_0 = arith.constant 0 : index
    %c0_1 = arith.constant 0 : index
    %0 = vector.load %arg1[%c0, %c0_0, %c0_1] : memref<2x8x32xf32, #tpu.memory_space<vmem>>, vector<2x8x32xf32>
    %1 = vector.shape_cast %0 : vector<2x8x32xf32> to vector<16x32xf32>
    %c0_2 = arith.constant 0 : index
    %c0_3 = arith.constant 0 : index
    %2 = vector.load %arg2[%c0_2, %c0_3] : memref<32x96xf32, #tpu.memory_space<vmem>>, vector<32x96xf32>
    %cst = arith.constant dense<0.000000e+00> : vector<16x96xf32>
    %3 = tpu.matmul %1, %2, %cst {dimension_numbers = #tpu.dot_dimension_numbers<[1], [0], [0], [1], [0, 0, 1, 1], [], []>} : vector<16x32xf32>, vector<32x96xf32>, vector<16x96xf32> -> vector<16x96xf32>
    %c0_4 = arith.constant 0 : index
    %c0_5 = arith.constant 0 : index
    %4 = vector.load %arg3[%c0_4, %c0_5] : memref<1x96xf32, #tpu.memory_space<vmem>>, vector<1x96xf32>
    %5 = vector.broadcast %4 : vector<1x96xf32> to vector<16x96xf32>
    %6 = arith.addf %3, %5 : vector<16x96xf32>
    %7 = vector.extract_strided_slice %6 {offsets = [0, 0], sizes = [16, 32], strides = [1, 1]} : vector<16x96xf32> to vector<16x32xf32>
    %8 = vector.shape_cast %7 : vector<16x32xf32> to vector<2x8x32xf32>
    %9 = vector.extract_strided_slice %6 {offsets = [0, 32], sizes = [16, 32], strides = [1, 1]} : vector<16x96xf32> to vector<16x32xf32>
    %10 = vector.shape_cast %9 : vector<16x32xf32> to vector<2x8x32xf32>
    %11 = vector.extract_strided_slice %6 {offsets = [0, 64], sizes = [16, 32], strides = [1, 1]} : vector<16x96xf32> to vector<16x32xf32>
    %12 = vector.shape_cast %11 : vector<16x32xf32> to vector<2x8x32xf32>
    %13 = arith.truncf %8 : vector<2x8x32xf32> to vector<2x8x32xbf16>
    %14 = arith.truncf %10 : vector<2x8x32xf32> to vector<2x8x32xbf16>
    %cst_6 = arith.constant dense<0.000000e+00> : vector<2x8x8xf32>
    %15 = tpu.matmul %13, %14, %cst_6 {dimension_numbers = #tpu.dot_dimension_numbers<[2], [2], [1], [1], [0, 0, 0, 1, 1, 1], [0], [0]>} : vector<2x8x32xbf16>, vector<2x8x32xbf16>, vector<2x8x8xf32> -> vector<2x8x8xf32>
    %cst_7 = arith.constant 0.176776692 : f32
    %16 = vector.broadcast %cst_7 : f32 to vector<2x8x8xf32>
    %17 = arith.mulf %15, %16 : vector<2x8x8xf32>
    %cst_8 = arith.constant dense<0xFF800000> : vector<2x8xf32>
    %18 = vector.multi_reduction <maximumf>, %17, %cst_8 [2] : vector<2x8x8xf32> to vector<2x8xf32>
    %19 = vector.shape_cast %18 : vector<2x8xf32> to vector<2x8x1xf32>
    %20 = vector.broadcast %19 : vector<2x8x1xf32> to vector<2x8x8xf32>
    %21 = arith.subf %17, %20 : vector<2x8x8xf32>
    %22 = math.exp %21 : vector<2x8x8xf32>
    %cst_9 = arith.constant dense<0.000000e+00> : vector<2x8xf32>
    %23 = vector.multi_reduction <add>, %22, %cst_9 [2] : vector<2x8x8xf32> to vector<2x8xf32>
    %24 = vector.shape_cast %23 : vector<2x8xf32> to vector<2x8x1xf32>
    %25 = tpu.reciprocal %24 {approx = true} : vector<2x8x1xf32> -> vector<2x8x1xf32>
    %26 = vector.broadcast %25 : vector<2x8x1xf32> to vector<2x8x8xf32>
    %27 = arith.mulf %22, %26 : vector<2x8x8xf32>
    %28 = arith.truncf %27 : vector<2x8x8xf32> to vector<2x8x8xbf16>
    %29 = arith.truncf %12 : vector<2x8x32xf32> to vector<2x8x32xbf16>
    %cst_10 = arith.constant dense<0.000000e+00> : vector<2x8x32xf32>
    %30 = tpu.matmul %28, %29, %cst_10 {dimension_numbers = #tpu.dot_dimension_numbers<[2], [1], [1], [2], [0, 0, 0, 1, 1, 2], [0], [0]>} : vector<2x8x8xbf16>, vector<2x8x32xbf16>, vector<2x8x32xf32> -> vector<2x8x32xf32>
    %c0_11 = arith.constant 0 : index
    %c0_12 = arith.constant 0 : index
    %c0_13 = arith.constant 0 : index
    %31 = vector.load %arg4[%c0_11, %c0_12, %c0_13] : memref<2x8x32xf32, #tpu.memory_space<vmem>>, vector<2x8x32xf32>
    tpu.vector_store %arg4[%c0_11, %c0_12, %c0_13], %30 {strides = array<i32>} : memref<2x8x32xf32, #tpu.memory_space<vmem>>, vector<2x8x32xf32>,
    return
  }
  func.func @transform_0(%arg0: i32) -> (i32, i32, i32) {
    %c0_i32 = arith.constant 0 : i32
    %c0_i32_0 = arith.constant 0 : i32
    %c0_i32_1 = arith.constant 0 : i32
    return %arg0, %c0_i32, %c0_i32_0 : i32, i32, i32
  }
  func.func @transform_1(%arg0: i32) -> (i32, i32) {
    %c0_i32 = arith.constant 0 : i32
    %c0_i32_0 = arith.constant 0 : i32
    %c0_i32_1 = arith.constant 0 : i32
    return %c0_i32, %c0_i32_0 : i32, i32
  }
  func.func @transform_2(%arg0: i32) -> (i32, i32) {
    %c0_i32 = arith.constant 0 : i32
    %c0_i32_0 = arith.constant 0 : i32
    %c0_i32_1 = arith.constant 0 : i32
    return %c0_i32, %c0_i32_0 : i32, i32
  }
  func.func @transform_3(%arg0: i32) -> (i32, i32, i32) {
    %c0_i32 = arith.constant 0 : i32
    %c0_i32_0 = arith.constant 0 : i32
    %c0_i32_1 = arith.constant 0 : i32
    return %arg0, %c0_i32, %c0_i32_0 : i32, i32, i32
  }
}

</mosaic_0001>

<llo_original>
// kernel: tpu_custom_call.1
$region0: #{tpu_custom_call.1}
  #allocation0 [shape = 'u32[]', space=smem, size = 0x4, offset = 0x4, fixed_abs, tag = 'smem constant byte address 0x4 - core index']
  #allocation1 [shape = 'u32[72,128]{1,0:T(1,128)}', space=vmem, size = 0x9000, scoped, tag = 'internal scratch']
  %s0 = inlined_call_operand.hbm [shape: f32[2,8,32], index: 0, kind: input, shape index: {}]
  %s1 = inlined_call_operand.hbm [shape: f32[32,96], index: 1, kind: input, shape index: {}]
  %s2 = inlined_call_operand.vmem [shape: f32[1,96], index: 2, kind: input, shape index: {}]
  %s3 = inlined_call_operand.hbm [shape: f32[2,8,32], index: 3, kind: output, shape index: {}]
  %s4 = sld [smem:[#allocation0]]
  $region30: #{tpu_custom_call.1} parent=0
    _
  %s6 = ssub.s32 1, %s4
  %s7 = scalar_select 0, %s6, %s4
  $region1: #{tpu_custom_call.1} parent=0
    #allocation2 [shape = 'u8[8192]{0}', space=vmem, size = 0x2000, scoped, tag = 'input window, operand 0, single buffered']
    #allocation3 [shape = 's32[1]{0}', space=sflag, size = 0x4, scoped, tag = 'scoped memory for tpu_custom_call.1']
    #allocation4 [shape = 's32[1]{0}', space=sflag, size = 0x4, scoped, tag = 'scoped memory for tpu_custom_call.1']
    #allocation5 [shape = 'u8[16384]{0}', space=vmem, size = 0x4000, scoped, tag = 'input window, operand 1, single buffered']
    #allocation6 [shape = 's32[1]{0}', space=sflag, size = 0x4, scoped, tag = 'scoped memory for tpu_custom_call.1']
    #allocation7 [shape = 'u8[8192]{0}', space=vmem, size = 0x2000, scoped, tag = 'output window, operand 0, single buffered']
    %8 = vsyncpa [#allocation3], 0
    %9 = vsyncpa [#allocation6], 0
    %10 = vsyncpa [#allocation4], 0
    // Predicated region
    $region2: #{tpu_custom_call.1} parent=1 // pred_check
      _
    $region3: #{tpu_custom_call.1} parent=1 // pred_check_branch
      %12 = sbr.rel (0) target = $region5
    $region4: #{tpu_custom_call.1} parent=1 // pred_region
      %14 = vsyncadd [#allocation3], 0
      %s15 = sshll.u32 %s0, 4
      %s16 = int_to_ptr.hbm [resolvable:$true] %s15
      %s17 = sshll.u32 [#allocation2], 4
      %s18 = int_to_ptr.vmem [resolvable:$true] %s17
      %23 = dma.hbm_to_vmem [thread:$0]  %s16, 256, %s18, [#allocation3], 128, 128, 8
    $region5: #{tpu_custom_call.1} parent=1 // pred_fallthru
      _
    // Predicated region
    $region6: #{tpu_custom_call.1} parent=1 // pred_check
      _
    $region7: #{tpu_custom_call.1} parent=1 // pred_check_branch
      %25 = sbr.rel (0) target = $region9
    $region8: #{tpu_custom_call.1} parent=1 // pred_region
      %27 = vsyncadd [#allocation6], 0
      %s28 = sshll.u32 %s1, 4
      %s29 = int_to_ptr.hbm [resolvable:$true] %s28
      %s30 = sshll.u32 [#allocation5], 4
      %s31 = int_to_ptr.vmem [resolvable:$true] %s30
      %36 = dma.hbm_to_vmem [thread:$0]  %s29, 512, %s31, [#allocation6], 128, 128, 8
    $region9: #{tpu_custom_call.1} parent=1 // pred_fallthru
      _
    // Predicated region
    $region10: #{tpu_custom_call.1} parent=1 // pred_check
      _
    $region11: #{tpu_custom_call.1} parent=1 // pred_check_branch
      %38 = sbr.rel (0) target = $region13
    $region12: #{tpu_custom_call.1} parent=1 // pred_region
      _
    $region13: #{tpu_custom_call.1} parent=1 // pred_fallthru
      _
    // Predicated region
    $region14: #{tpu_custom_call.1} parent=1 // pred_check
      _
    $region15: #{tpu_custom_call.1} parent=1 // pred_check_branch
      %40 = sbr.rel (0) target = $region17
    $region16: #{tpu_custom_call.1} parent=1 // pred_region
      %42 = dma.done [#allocation3], 256
    $region17: #{tpu_custom_call.1} parent=1 // pred_fallthru
      _
    // Predicated region
    $region18: #{tpu_custom_call.1} parent=1 // pred_check
      _
    $region19: #{tpu_custom_call.1} parent=1 // pred_check_branch
      %44 = sbr.rel (0) target = $region21
    $region20: #{tpu_custom_call.1} parent=1 // pred_region
      %46 = dma.done [#allocation6], 512
    $region21: #{tpu_custom_call.1} parent=1 // pred_fallthru
      _
    %v48 = vld [vmem:[#allocation2] sm:$0xff]
    %v49 = vld [vmem:[#allocation2 + $0x8] sm:$0xff]
    %v50 = vld [vmem:[#allocation5] sm:$0xff]
    %v51 = vld [vmem:[#allocation5 + $0x8] sm:$0xff]
    %v52 = vld [vmem:[#allocation5 + $0x10] sm:$0xff]
    %v53 = vld [vmem:[#allocation5 + $0x18] sm:$0xff]
    %v54 = vld [vmem:[%s2] sm:$0x1]
    %v56 = vperm.slane %v54, 0
    %vm58 = vcmask 261120
    %v60 = vsel %vm58, %v48, 0
    %v63 = vsel %vm58, %v49, 0
    %65 = vmatpush.msra.mxu0 0.0
    %66 = vmatpush.msra.mxu0 0.0
    %67 = vmatpush.msra.mxu0 0.0
    %68 = vmatpush.msra.mxu0 0.0
    %69 = vmatpush.msra.mxu0 0.0
    %70 = vmatpush.msra.mxu0 0.0
    %71 = vmatpush.msra.mxu0 0.0
    %72 = vmatpush.msra.mxu0 0.0
    %73 = vmatpush.msra.mxu0 0.0
    %74 = vmatpush.msra.mxu0 0.0
    %75 = vmatpush.msra.mxu0 0.0
    %76 = vmatpush.msra.mxu0 0.0
    %77 = vmatpush.msra.mxu0 %v53
    %78 = vmatpush.msra.mxu0 %v52
    %79 = vmatpush.msra.mxu0 %v51
    %80 = vmatpush.msra.mxu0 %v50
    %81 = vmatmul.f32.gmra.mxu0 %v60
    %v82 = vpop.f32.mrf.mxu0
    %v83 = vadd.f32 %v56, %v82
    %84 = vmatmul.f32.gmra.mxu0 %v63
    %v85 = vpop.f32.mrf.mxu0
    %v86 = vadd.f32 %v56, %v85
    %87 = vdwg.mxu0
    %v88 = vpack.c.bf16 %v83, %v83
    %v89 = vpack.c.bf16 %v86, %v86
    %v91 = vunpack.c.l.b16 %v88
    %v92 = vpack.c.b16 %v91, %v91
    %93 = vrot.lane.b32.xlu0 %v92, 96
    %v94 = vpop.permute.xlu0 %93
    %v96 = vsel %vm58, %v88, 0
    %v99 = vsel %vm58, %v94, 0
    %101 = vmatpush.bf16.xpose.msra.mxu0 0
    %102 = vmatpush.bf16.xpose.msra.mxu0 0
    %103 = vmatpush.bf16.xpose.msra.mxu0 0
    %104 = vmatpush.bf16.xpose.msra.mxu0 0
    %105 = vmatpush.bf16.xpose.msra.mxu0 0
    %106 = vmatpush.bf16.xpose.msra.mxu0 0
    %107 = vmatpush.bf16.xpose.msra.mxu0 0
    %108 = vmatpush.bf16.xpose.msra.mxu0 %v99
    %109 = vmatmul.bf16.gmra.mxu0 %v96
    %v110 = vpop.f32.mrf.mxu0
    %v111 = vadd.f32 0.0, %v110
    %v112 = vpop.f32.mrf.mxu0
    %113 = vdwg.mxu0
    %v115 = vunpack.c.l.b16 %v89
    %v116 = vpack.c.b16 %v115, %v115
    %117 = vrot.lane.b32.xlu0 %v116, 96
    %v118 = vpop.permute.xlu0 %117
    %v120 = vsel %vm58, %v89, 0
    %v123 = vsel %vm58, %v118, 0
    %125 = vmatpush.bf16.xpose.msra.mxu0 0
    %126 = vmatpush.bf16.xpose.msra.mxu0 0
    %127 = vmatpush.bf16.xpose.msra.mxu0 0
    %128 = vmatpush.bf16.xpose.msra.mxu0 0
    %129 = vmatpush.bf16.xpose.msra.mxu0 0
    %130 = vmatpush.bf16.xpose.msra.mxu0 0
    %131 = vmatpush.bf16.xpose.msra.mxu0 0
    %132 = vmatpush.bf16.xpose.msra.mxu0 %v123
    %133 = vmatmul.bf16.gmra.mxu0 %v120
    %v134 = vpop.f32.mrf.mxu0
    %v135 = vadd.f32 0.0, %v134
    %v136 = vpop.f32.mrf.mxu0
    %137 = vdwg.mxu0
    %v138 = vmul.f32 %v111, 0.17677669
    %v139 = vmul.f32 %v135, 0.17677669
    %vm140 = vcmask 64512
    %v141 = vsel %vm140, %v138, -inf
    %142 = vmax.xlane.f32.xlu0 %v141
    %v143 = vpop.xlane.xlu0 %142
    %v144 = vsel %vm140, %v139, -inf
    %145 = vmax.xlane.f32.xlu0 %v144
    %v146 = vpop.xlane.xlu0 %145
    %v147 = vsub.f32 %v138, %v143
    %v148 = vsub.f32 %v139, %v146
    %v149 = vmul.f32 %v147, 1.442695
    %v150 = vpow.pop %v149
    %v151 = vmul.f32 %v148, 1.442695
    %v152 = vpow.pop %v151
    %v153 = vsel %vm140, %v150, 0.0
    %154 = vadd.xlane.f32.xlu0 %v153
    %v155 = vpop.xlane.xlu0 %154
    %v156 = vsel %vm140, %v152, 0.0
    %157 = vadd.xlane.f32.xlu0 %v156
    %v158 = vpop.xlane.xlu0 %157
    %v159 = vrcp.pop %v155
    %v160 = vrcp.pop %v158
    %v161 = vmul.f32 %v150, %v159
    %v162 = vmul.f32 %v152, %v160
    %v163 = vpack.c.bf16 %v161, %v161
    %v164 = vpack.c.bf16 %v162, %v162
    %165 = vrot.lane.b32.xlu0 %v92, 64
    %v166 = vpop.permute.xlu0 %165
    %v168 = vsel %vm140, %v163, 0
    %vm170 = vcmask 1043456
    %v172 = vsel %vm170, %v166, 0
    %174 = vmatpush.bf16.msra.mxu0 0
    %175 = vmatpush.bf16.msra.mxu0 0
    %176 = vmatpush.bf16.msra.mxu0 0
    %177 = vmatpush.bf16.msra.mxu0 0
    %178 = vmatpush.bf16.msra.mxu0 0
    %179 = vmatpush.bf16.msra.mxu0 0
    %180 = vmatpush.bf16.msra.mxu0 0
    %181 = vmatpush.bf16.msra.mxu0 %v172
    %182 = vmatmul.bf16.gmra.mxu0 %v168
    %v183 = vpop.f32.mrf.mxu0
    %v184 = vadd.f32 0.0, %v183
    %v185 = vpop.f32.mrf.mxu0
    %186 = vdwg.mxu0
    %187 = vrot.lane.b32.xlu0 %v116, 64
    %v188 = vpop.permute.xlu0 %187
    %v190 = vsel %vm140, %v164, 0
    %v193 = vsel %vm170, %v188, 0
    %195 = vmatpush.bf16.msra.mxu0 0
    %196 = vmatpush.bf16.msra.mxu0 0
    %197 = vmatpush.bf16.msra.mxu0 0
    %198 = vmatpush.bf16.msra.mxu0 0
    %199 = vmatpush.bf16.msra.mxu0 0
    %200 = vmatpush.bf16.msra.mxu0 0
    %201 = vmatpush.bf16.msra.mxu0 0
    %202 = vmatpush.bf16.msra.mxu0 %v193
    %203 = vmatmul.bf16.gmra.mxu0 %v190
    %v204 = vpop.f32.mrf.mxu0
    %v205 = vadd.f32 0.0, %v204
    %v206 = vpop.f32.mrf.mxu0
    %207 = vdwg.mxu0
    %208 = vst.msk [vmem:[#allocation7] sm:$0xff] %vm58, %v184
    %209 = vst.msk [vmem:[#allocation7 + $0x8] sm:$0xff] %vm58, %v205
    // Predicated region
    $region22: #{tpu_custom_call.1} parent=1 // pred_check
      _
    $region23: #{tpu_custom_call.1} parent=1 // pred_check_branch
      %211 = sbr.rel (0) target = $region25
    $region24: #{tpu_custom_call.1} parent=1 // pred_region
      %213 = vsyncadd [#allocation4], 0
      %s214 = sshll.u32 [#allocation7], 4
      %s215 = int_to_ptr.vmem [resolvable:$true] %s214
      %s216 = sshll.u32 %s3, 4
      %s217 = int_to_ptr.hbm [resolvable:$true] %s216
      %222 = dma.vmem_to_hbm [thread:$0]  %s215, 256, %s217, [#allocation4], 128, 128, 8
    $region25: #{tpu_custom_call.1} parent=1 // pred_fallthru
      _
    // Predicated region
    $region26: #{tpu_custom_call.1} parent=1 // pred_check
      _
    $region27: #{tpu_custom_call.1} parent=1 // pred_check_branch
      %224 = sbr.rel (0) target = $region29
    $region28: #{tpu_custom_call.1} parent=1 // pred_region
      %226 = dma.done [#allocation4], 256
    $region29: #{tpu_custom_call.1} parent=1 // pred_fallthru
      _
    %227 = vsyncpa [#allocation3], 1
    %228 = vsyncpa [#allocation6], 1
    %229 = vsyncpa [#allocation4], 1

</llo_original>
